<compile_context>
chip_gen: v5e
topology: v5e:2x2
jax: 0.10.0
libtpu: 0.0.40
codegen_flags: <defaults>
</compile_context>

<pallas_src>
import functools
import math

import jax
import jax.numpy as jnp
from jax.experimental import pallas as pl
from jax.experimental.pallas import tpu as pltpu


# ----------------------------------------------------------------------------
# Helpers
# ----------------------------------------------------------------------------
def _round_up(x: int, m: int) -> int:
    return ((x + m - 1) // m) * m


def _vmem_capacity_bytes() -> int:
    """Per-core VMEM capacity; conservative (v7x) default if the query fails."""
    try:
        info = pltpu.get_tpu_info()
        cap = int(getattr(info, "vmem_capacity_bytes", 0))
        if cap > 0:
            return cap
    except Exception:
        pass
    return 64 * 1024 * 1024


# ----------------------------------------------------------------------------
# Parameter construction (plain JAX glue; mirrors get_embedding in the module)
# ----------------------------------------------------------------------------
def get_embedding(num_embeddings: int, embedding_dim: int, offset=None):
    half_dim = embedding_dim // 2
    emb = math.log(10000.0) / (half_dim - 1)
    emb = jnp.exp(jnp.arange(half_dim, dtype=jnp.float32) * -emb)
    emb = jnp.arange(num_embeddings, dtype=jnp.float32)[:, None] * emb[None, :]
    emb = jnp.concatenate([jnp.sin(emb), jnp.cos(emb)], axis=1).reshape(num_embeddings, -1)
    if embedding_dim % 2 == 1:
        emb = jnp.concatenate([emb, jnp.zeros((num_embeddings, 1), jnp.float32)], axis=1)
    if offset is not None:
        emb = emb.at[offset - 1, :].set(0.0)
    return emb


# ----------------------------------------------------------------------------
# Kernel 1: gather from a VMEM-resident table (primary path)
# ----------------------------------------------------------------------------
def _gather_from_vmem_kernel(pos_ref, w_ref, out_ref, *, rows_per_step: int):
    """pos_ref : SMEM (n_rows_padded,) int32 — scalar-prefetched row indices
       w_ref   : VMEM (R, D_pad)             — full table, resident across steps
       out_ref : VMEM (rows_per_step, D_pad) — output block for this grid step
    """
    base = pl.program_id(0) * rows_per_step
    # Static unroll: the store row r is static; only the table row p is dynamic.
    for r in range(rows_per_step):
        p = pos_ref[base + r]                                   # SMEM scalar read
        out_ref[pl.ds(r, 1), :] = w_ref[pl.ds(p, 1), :]         # in-VMEM row copy


# ----------------------------------------------------------------------------
# Kernel 2: DMA row gather from HBM (fallback for tables too large for VMEM)
# ----------------------------------------------------------------------------
def _gather_from_hbm_kernel(pos_ref, w_hbm, out_ref, sems, *, rows_per_step: int):
    """pos_ref : SMEM (n_rows_padded,) int32
       w_hbm   : HBM  (R, D_pad)             — table stays in HBM
       out_ref : VMEM (rows_per_step, D_pad)
       sems    : DMA semaphores, one per in-flight row copy
    """
    base = pl.program_id(0) * rows_per_step
    copies = []
    for r in range(rows_per_step):                 # static, fully unrolled
        p = pos_ref[base + r]                      # SMEM scalar read
        cp = pltpu.make_async_copy(w_hbm.at[p], out_ref.at[r], sems.at[r])
        cp.start()                                 # all rows' DMAs in flight
        copies.append(cp)
    for cp in copies:                              # drain
        cp.wait()


# ----------------------------------------------------------------------------
# Wrapper
# ----------------------------------------------------------------------------
def fsgpt_moe_sinusoidal_positional_embedding(input_ids, weights, *,
                                              padding_idx: int, offset: int = 2,
                                              rows_per_step: int = 128,
                                              force_hbm_gather: bool = False):
    """input_ids: (bsz, seq_len) int token ids; weights: (R, D) float32 table.

    rows_per_step: rows gathered per grid step (multiple of 8; tune 128-512).
    force_hbm_gather: force the HBM-DMA fallback even if the table fits VMEM.
    """
    B, S = input_ids.shape
    R, D = weights.shape

    # Mirror the module's lazy table growth: guarantees positions < R, so the
    # gather can never read out of bounds.
    max_pos = offset + S
    if max_pos > R:
        weights = get_embedding(max_pos, D, offset)
        R = max_pos

    # Lane padding: keep the last dim a multiple of 128 so every transfer is
    # (8,128)-tile aligned (no masked partial stores). Pad lanes sliced off below.
    D_pad = _round_up(max(D, 1), 128)
    if D_pad != D:
        weights = jnp.pad(weights, ((0, 0), (0, D_pad - D)))
    itemsize = jnp.dtype(weights.dtype).itemsize

    # make_positions: cheap O(B*S) cumsum in XLA (wrapper side).
    ids = input_ids.astype(jnp.int32)
    mask = (ids != padding_idx).astype(jnp.int32)
    positions = (jnp.cumsum(mask, axis=1) * mask + (offset - 1)).astype(jnp.int32)
    pos_flat = positions.reshape(-1)                                  # (B*S,)

    n_rows = B * S
    # Clamp rows_per_step: multiple of 8, no bigger than the (8-rounded) problem.
    rows_per_step = max(8, min(int(rows_per_step), _round_up(n_rows, 8)))
    rows_per_step = _round_up(rows_per_step, 8)
    n_pad = _round_up(n_rows, rows_per_step)
    if n_pad != n_rows:
        # Pad with the zero row (offset-1); padded rows are sliced off below.
        pos_flat = jnp.concatenate(
            [pos_flat, jnp.full((n_pad - n_rows,), offset - 1, jnp.int32)])
    n_chunks = n_pad // rows_per_step

    # ---- Path selection: table-in-VMEM vs HBM row gather --------------------
    cap = _vmem_capacity_bytes()
    table_bytes = _round_up(R, 8) * D_pad * itemsize
    out_block_bytes = rows_per_step * D_pad * itemsize
    # Account for possible double-buffering of both the resident table block
    # and the output block, plus headroom.
    vmem_needed = 2 * table_bytes + 2 * out_block_bytes + (2 << 20)
    use_vmem_table = (not force_hbm_gather) and (vmem_needed <= int(0.75 * cap))

    out_bytes = n_pad * D_pad * itemsize
    if use_vmem_table:
        kernel = functools.partial(_gather_from_vmem_kernel,
                                   rows_per_step=rows_per_step)
        grid_spec = pltpu.PrefetchScalarGridSpec(
            num_scalar_prefetch=1,                           # positions -> SMEM
            grid=(n_chunks,),
            in_specs=[pl.BlockSpec((R, D_pad), lambda c, pos: (0, 0))],  # resident
            out_specs=pl.BlockSpec((rows_per_step, D_pad), lambda c, pos: (c, 0)),
        )
        vmem_limit = int(min(cap, max(32 << 20, vmem_needed + (8 << 20))))
        bytes_accessed = table_bytes + out_bytes + n_pad * 4
    else:
        kernel = functools.partial(_gather_from_hbm_kernel,
                                   rows_per_step=rows_per_step)
        grid_spec = pltpu.PrefetchScalarGridSpec(
            num_scalar_prefetch=1,                           # positions -> SMEM
            grid=(n_chunks,),
            in_specs=[pl.BlockSpec(memory_space=pl.ANY)],    # table stays in HBM
            out_specs=pl.BlockSpec((rows_per_step, D_pad), lambda c, pos: (c, 0)),
            scratch_shapes=[pltpu.SemaphoreType.DMA((rows_per_step,))],
        )
        vmem_limit = int(min(cap, max(32 << 20, 4 * out_block_bytes + (4 << 20))))
        bytes_accessed = 2 * out_bytes + n_pad * 4

    out_flat = pl.pallas_call(
        kernel,
        out_shape=jax.ShapeDtypeStruct((n_pad, D_pad), weights.dtype),
        grid_spec=grid_spec,
        compiler_params=pltpu.CompilerParams(
            dimension_semantics=("parallel",),               # megacore-shardable
            vmem_limit_bytes=vmem_limit,
        ),
        cost_estimate=pl.CostEstimate(flops=0, transcendentals=0,
                                      bytes_accessed=int(bytes_accessed)),
    )(pos_flat, weights)

    out = out_flat[:n_rows]
    if D_pad != D:
        out = out[:, :D]
    return out.reshape(B, S, D)


# ----------------------------------------------------------------------------
# Demo / correctness check
# ----------------------------------------------------------------------------
if __name__ == "__main__":
    key = jax.random.PRNGKey(0)

    bsz, seq_len = 2, 8
    embedding_dim = 32
    padding_idx = 1
    num_positions = 16
    offset = 2
    vocab = 50

    # Random ids in [2, vocab) so none collide with padding_idx, then add
    # right padding like the module expects.
    ids = jax.random.randint(key, (bsz, seq_len), 2, vocab, dtype=jnp.int32)
    ids = ids.at[0, 5:].set(padding_idx)
    ids = ids.at[1, 3:].set(padding_idx)

    # Deterministic "parameters": sinusoidal table, as built in __init__.
    weights = get_embedding(num_positions + offset, embedding_dim, offset)

    # Pure-JAX reference of the PyTorch forward.
    mask = (ids != padding_idx).astype(jnp.int32)
    positions = jnp.cumsum(mask, axis=1) * mask + offset - 1
    ref = jnp.take(weights, positions.reshape(-1), axis=0).reshape(
        bsz, seq_len, embedding_dim)

    # Primary path: table staged in VMEM, in-VMEM row gather.
    out = fsgpt_moe_sinusoidal_positional_embedding(
        ids, weights, padding_idx=padding_idx, offset=offset)
    out = jax.block_until_ready(out)
    assert out.shape == (bsz, seq_len, embedding_dim)
    assert out.dtype == jnp.float32
    assert jnp.allclose(out, ref, atol=1e-6), "VMEM-gather path mismatch vs reference"

    # Fallback path (used when the table exceeds the VMEM budget): HBM DMA gather.
    out_hbm = fsgpt_moe_sinusoidal_positional_embedding(
        ids, weights, padding_idx=padding_idx, offset=offset,
        force_hbm_gather=True)
    out_hbm = jax.block_until_ready(out_hbm)
    assert jnp.allclose(out_hbm, ref, atol=1e-6), "HBM-gather path mismatch vs reference"

    print("KERNEL_OK")
</pallas_src>

<mosaic_0001>
module attributes {stable_mosaic.version = 11 : i64} {
  func.func @_gather_from_vmem_kernel(%arg0: i32, %arg1: memref<16xi32, #tpu.memory_space<smem>>, %arg2: memref<18x128xf32, #tpu.memory_space<vmem>>, %arg3: memref<16x128xf32, #tpu.memory_space<vmem>>) attributes {dimension_semantics = [#tpu.dimension_semantics<parallel>], iteration_bounds = array<i64: 1>, scalar_prefetch = 1 : i64, scratch_operands = 0 : i64, tpu.core_type = #tpu.core_type<tc>, window_params = [{pipeline_mode = #tpu.pipeline_mode<synchronous>, transform_indices = @transform_0, window_bounds = array<i64: 18, 128>}, {transform_indices = @transform_1, window_bounds = array<i64: 16, 128>}]} {
    %c16_i32 = arith.constant 16 : i32
    %0 = arith.muli %arg0, %c16_i32 : i32
    %c0_i32 = arith.constant 0 : i32
    %1 = arith.addi %0, %c0_i32 : i32
    %2 = arith.index_cast %1 : i32 to index
    %3 = memref.load %arg1[%2] : memref<16xi32, #tpu.memory_space<smem>>
    %4 = arith.index_cast %3 : i32 to index
    %c0 = arith.constant 0 : index
    %5 = vector.load %arg2[%4, %c0] : memref<18x128xf32, #tpu.memory_space<vmem>>, vector<1x128xf32>
    %c0_0 = arith.constant 0 : index
    %c0_1 = arith.constant 0 : index
    %6 = vector.load %arg3[%c0_0, %c0_1] : memref<16x128xf32, #tpu.memory_space<vmem>>, vector<1x128xf32>
    tpu.vector_store %arg3[%c0_0, %c0_1], %5 {strides = array<i32>} : memref<16x128xf32, #tpu.memory_space<vmem>>, vector<1x128xf32>,
    %c1_i32 = arith.constant 1 : i32
    %7 = arith.addi %0, %c1_i32 : i32
    %8 = arith.index_cast %7 : i32 to index
    %9 = memref.load %arg1[%8] : memref<16xi32, #tpu.memory_space<smem>>
    %10 = arith.index_cast %9 : i32 to index
    %c0_2 = arith.constant 0 : index
    %11 = vector.load %arg2[%10, %c0_2] : memref<18x128xf32, #tpu.memory_space<vmem>>, vector<1x128xf32>
    %c1 = arith.constant 1 : index
    %c0_3 = arith.constant 0 : index
    %12 = vector.load %arg3[%c1, %c0_3] : memref<16x128xf32, #tpu.memory_space<vmem>>, vector<1x128xf32>
    tpu.vector_store %arg3[%c1, %c0_3], %11 {strides = array<i32>} : memref<16x128xf32, #tpu.memory_space<vmem>>, vector<1x128xf32>,
    %c2_i32 = arith.constant 2 : i32
    %13 = arith.addi %0, %c2_i32 : i32
    %14 = arith.index_cast %13 : i32 to index
    %15 = memref.load %arg1[%14] : memref<16xi32, #tpu.memory_space<smem>>
    %16 = arith.index_cast %15 : i32 to index
    %c0_4 = arith.constant 0 : index
    %17 = vector.load %arg2[%16, %c0_4] : memref<18x128xf32, #tpu.memory_space<vmem>>, vector<1x128xf32>
    %c2 = arith.constant 2 : index
    %c0_5 = arith.constant 0 : index
    %18 = vector.load %arg3[%c2, %c0_5] : memref<16x128xf32, #tpu.memory_space<vmem>>, vector<1x128xf32>
    tpu.vector_store %arg3[%c2, %c0_5], %17 {strides = array<i32>} : memref<16x128xf32, #tpu.memory_space<vmem>>, vector<1x128xf32>,
    %c3_i32 = arith.constant 3 : i32
    %19 = arith.addi %0, %c3_i32 : i32
    %20 = arith.index_cast %19 : i32 to index
    %21 = memref.load %arg1[%20] : memref<16xi32, #tpu.memory_space<smem>>
    %22 = arith.index_cast %21 : i32 to index
    %c0_6 = arith.constant 0 : index
    %23 = vector.load %arg2[%22, %c0_6] : memref<18x128xf32, #tpu.memory_space<vmem>>, vector<1x128xf32>
    %c3 = arith.constant 3 : index
    %c0_7 = arith.constant 0 : index
    %24 = vector.load %arg3[%c3, %c0_7] : memref<16x128xf32, #tpu.memory_space<vmem>>, vector<1x128xf32>
    tpu.vector_store %arg3[%c3, %c0_7], %23 {strides = array<i32>} : memref<16x128xf32, #tpu.memory_space<vmem>>, vector<1x128xf32>,
    %c4_i32 = arith.constant 4 : i32
    %25 = arith.addi %0, %c4_i32 : i32
    %26 = arith.index_cast %25 : i32 to index
    %27 = memref.load %arg1[%26] : memref<16xi32, #tpu.memory_space<smem>>
    %28 = arith.index_cast %27 : i32 to index
    %c0_8 = arith.constant 0 : index
    %29 = vector.load %arg2[%28, %c0_8] : memref<18x128xf32, #tpu.memory_space<vmem>>, vector<1x128xf32>
    %c4 = arith.constant 4 : index
    %c0_9 = arith.constant 0 : index
    %30 = vector.load %arg3[%c4, %c0_9] : memref<16x128xf32, #tpu.memory_space<vmem>>, vector<1x128xf32>
    tpu.vector_store %arg3[%c4, %c0_9], %29 {strides = array<i32>} : memref<16x128xf32, #tpu.memory_space<vmem>>, vector<1x128xf32>,
    %c5_i32 = arith.constant 5 : i32
    %31 = arith.addi %0, %c5_i32 : i32
    %32 = arith.index_cast %31 : i32 to index
    %33 = memref.load %arg1[%32] : memref<16xi32, #tpu.memory_space<smem>>
    %34 = arith.index_cast %33 : i32 to index
    %c0_10 = arith.constant 0 : index
    %35 = vector.load %arg2[%34, %c0_10] : memref<18x128xf32, #tpu.memory_space<vmem>>, vector<1x128xf32>
    %c5 = arith.constant 5 : index
    %c0_11 = arith.constant 0 : index
    %36 = vector.load %arg3[%c5, %c0_11] : memref<16x128xf32, #tpu.memory_space<vmem>>, vector<1x128xf32>
    tpu.vector_store %arg3[%c5, %c0_11], %35 {strides = array<i32>} : memref<16x128xf32, #tpu.memory_space<vmem>>, vector<1x128xf32>,
    %c6_i32 = arith.constant 6 : i32
    %37 = arith.addi %0, %c6_i32 : i32
    %38 = arith.index_cast %37 : i32 to index
    %39 = memref.load %arg1[%38] : memref<16xi32, #tpu.memory_space<smem>>
    %40 = arith.index_cast %39 : i32 to index
    %c0_12 = arith.constant 0 : index
    %41 = vector.load %arg2[%40, %c0_12] : memref<18x128xf32, #tpu.memory_space<vmem>>, vector<1x128xf32>
    %c6 = arith.constant 6 : index
    %c0_13 = arith.constant 0 : index
    %42 = vector.load %arg3[%c6, %c0_13] : memref<16x128xf32, #tpu.memory_space<vmem>>, vector<1x128xf32>
    tpu.vector_store %arg3[%c6, %c0_13], %41 {strides = array<i32>} : memref<16x128xf32, #tpu.memory_space<vmem>>, vector<1x128xf32>,
    %c7_i32 = arith.constant 7 : i32
    %43 = arith.addi %0, %c7_i32 : i32
    %44 = arith.index_cast %43 : i32 to index
    %45 = memref.load %arg1[%44] : memref<16xi32, #tpu.memory_space<smem>>
    %46 = arith.index_cast %45 : i32 to index
    %c0_14 = arith.constant 0 : index
    %47 = vector.load %arg2[%46, %c0_14] : memref<18x128xf32, #tpu.memory_space<vmem>>, vector<1x128xf32>
    %c7 = arith.constant 7 : index
    %c0_15 = arith.constant 0 : index
    %48 = vector.load %arg3[%c7, %c0_15] : memref<16x128xf32, #tpu.memory_space<vmem>>, vector<1x128xf32>
    tpu.vector_store %arg3[%c7, %c0_15], %47 {strides = array<i32>} : memref<16x128xf32, #tpu.memory_space<vmem>>, vector<1x128xf32>,
    %c8_i32 = arith.constant 8 : i32
    %49 = arith.addi %0, %c8_i32 : i32
    %50 = arith.index_cast %49 : i32 to index
    %51 = memref.load %arg1[%50] : memref<16xi32, #tpu.memory_space<smem>>
    %52 = arith.index_cast %51 : i32 to index
    %c0_16 = arith.constant 0 : index
    %53 = vector.load %arg2[%52, %c0_16] : memref<18x128xf32, #tpu.memory_space<vmem>>, vector<1x128xf32>
    %c8 = arith.constant 8 : index
    %c0_17 = arith.constant 0 : index
    %54 = vector.load %arg3[%c8, %c0_17] : memref<16x128xf32, #tpu.memory_space<vmem>>, vector<1x128xf32>
    tpu.vector_store %arg3[%c8, %c0_17], %53 {strides = array<i32>} : memref<16x128xf32, #tpu.memory_space<vmem>>, vector<1x128xf32>,
    %c9_i32 = arith.constant 9 : i32
    %55 = arith.addi %0, %c9_i32 : i32
    %56 = arith.index_cast %55 : i32 to index
    %57 = memref.load %arg1[%56] : memref<16xi32, #tpu.memory_space<smem>>
    %58 = arith.index_cast %57 : i32 to index
    %c0_18 = arith.constant 0 : index
    %59 = vector.load %arg2[%58, %c0_18] : memref<18x128xf32, #tpu.memory_space<vmem>>, vector<1x128xf32>
    %c9 = arith.constant 9 : index
    %c0_19 = arith.constant 0 : index
    %60 = vector.load %arg3[%c9, %c0_19] : memref<16x128xf32, #tpu.memory_space<vmem>>, vector<1x128xf32>
    tpu.vector_store %arg3[%c9, %c0_19], %59 {strides = array<i32>} : memref<16x128xf32, #tpu.memory_space<vmem>>, vector<1x128xf32>,
    %c10_i32 = arith.constant 10 : i32
    %61 = arith.addi %0, %c10_i32 : i32
    %62 = arith.index_cast %61 : i32 to index
    %63 = memref.load %arg1[%62] : memref<16xi32, #tpu.memory_space<smem>>
    %64 = arith.index_cast %63 : i32 to index
    %c0_20 = arith.constant 0 : index
    %65 = vector.load %arg2[%64, %c0_20] : memref<18x128xf32, #tpu.memory_space<vmem>>, vector<1x128xf32>
    %c10 = arith.constant 10 : index
    %c0_21 = arith.constant 0 : index
    %66 = vector.load %arg3[%c10, %c0_21] : memref<16x128xf32, #tpu.memory_space<vmem>>, vector<1x128xf32>
    tpu.vector_store %arg3[%c10, %c0_21], %65 {strides = array<i32>} : memref<16x128xf32, #tpu.memory_space<vmem>>, vector<1x128xf32>,
    %c11_i32 = arith.constant 11 : i32
    %67 = arith.addi %0, %c11_i32 : i32
    %68 = arith.index_cast %67 : i32 to index
    %69 = memref.load %arg1[%68] : memref<16xi32, #tpu.memory_space<smem>>
    %70 = arith.index_cast %69 : i32 to index
    %c0_22 = arith.constant 0 : index
    %71 = vector.load %arg2[%70, %c0_22] : memref<18x128xf32, #tpu.memory_space<vmem>>, vector<1x128xf32>
    %c11 = arith.constant 11 : index
    %c0_23 = arith.constant 0 : index
    %72 = vector.load %arg3[%c11, %c0_23] : memref<16x128xf32, #tpu.memory_space<vmem>>, vector<1x128xf32>
    tpu.vector_store %arg3[%c11, %c0_23], %71 {strides = array<i32>} : memref<16x128xf32, #tpu.memory_space<vmem>>, vector<1x128xf32>,
    %c12_i32 = arith.constant 12 : i32
    %73 = arith.addi %0, %c12_i32 : i32
    %74 = arith.index_cast %73 : i32 to index
    %75 = memref.load %arg1[%74] : memref<16xi32, #tpu.memory_space<smem>>
    %76 = arith.index_cast %75 : i32 to index
    %c0_24 = arith.constant 0 : index
    %77 = vector.load %arg2[%76, %c0_24] : memref<18x128xf32, #tpu.memory_space<vmem>>, vector<1x128xf32>
    %c12 = arith.constant 12 : index
    %c0_25 = arith.constant 0 : index
    %78 = vector.load %arg3[%c12, %c0_25] : memref<16x128xf32, #tpu.memory_space<vmem>>, vector<1x128xf32>
    tpu.vector_store %arg3[%c12, %c0_25], %77 {strides = array<i32>} : memref<16x128xf32, #tpu.memory_space<vmem>>, vector<1x128xf32>,
    %c13_i32 = arith.constant 13 : i32
    %79 = arith.addi %0, %c13_i32 : i32
    %80 = arith.index_cast %79 : i32 to index
    %81 = memref.load %arg1[%80] : memref<16xi32, #tpu.memory_space<smem>>
    %82 = arith.index_cast %81 : i32 to index
    %c0_26 = arith.constant 0 : index
    %83 = vector.load %arg2[%82, %c0_26] : memref<18x128xf32, #tpu.memory_space<vmem>>, vector<1x128xf32>
    %c13 = arith.constant 13 : index
    %c0_27 = arith.constant 0 : index
    %84 = vector.load %arg3[%c13, %c0_27] : memref<16x128xf32, #tpu.memory_space<vmem>>, vector<1x128xf32>
    tpu.vector_store %arg3[%c13, %c0_27], %83 {strides = array<i32>} : memref<16x128xf32, #tpu.memory_space<vmem>>, vector<1x128xf32>,
    %c14_i32 = arith.constant 14 : i32
    %85 = arith.addi %0, %c14_i32 : i32
    %86 = arith.index_cast %85 : i32 to index
    %87 = memref.load %arg1[%86] : memref<16xi32, #tpu.memory_space<smem>>
    %88 = arith.index_cast %87 : i32 to index
    %c0_28 = arith.constant 0 : index
    %89 = vector.load %arg2[%88, %c0_28] : memref<18x128xf32, #tpu.memory_space<vmem>>, vector<1x128xf32>
    %c14 = arith.constant 14 : index
    %c0_29 = arith.constant 0 : index
    %90 = vector.load %arg3[%c14, %c0_29] : memref<16x128xf32, #tpu.memory_space<vmem>>, vector<1x128xf32>
    tpu.vector_store %arg3[%c14, %c0_29], %89 {strides = array<i32>} : memref<16x128xf32, #tpu.memory_space<vmem>>, vector<1x128xf32>,
    %c15_i32 = arith.constant 15 : i32
    %91 = arith.addi %0, %c15_i32 : i32
    %92 = arith.index_cast %91 : i32 to index
    %93 = memref.load %arg1[%92] : memref<16xi32, #tpu.memory_space<smem>>
    %94 = arith.index_cast %93 : i32 to index
    %c0_30 = arith.constant 0 : index
    %95 = vector.load %arg2[%94, %c0_30] : memref<18x128xf32, #tpu.memory_space<vmem>>, vector<1x128xf32>
    %c15 = arith.constant 15 : index
    %c0_31 = arith.constant 0 : index
    %96 = vector.load %arg3[%c15, %c0_31] : memref<16x128xf32, #tpu.memory_space<vmem>>, vector<1x128xf32>
    tpu.vector_store %arg3[%c15, %c0_31], %95 {strides = array<i32>} : memref<16x128xf32, #tpu.memory_space<vmem>>, vector<1x128xf32>,
    return
  }
  func.func @transform_0(%arg0: i32, %arg1: memref<16xi32, #tpu.memory_space<smem>>) -> (i32, i32) {
    %c0_i32 = arith.constant 0 : i32
    %c0_i32_0 = arith.constant 0 : i32
    %c0_i32_1 = arith.constant 0 : i32
    return %c0_i32, %c0_i32_0 : i32, i32
  }
  func.func @transform_1(%arg0: i32, %arg1: memref<16xi32, #tpu.memory_space<smem>>) -> (i32, i32) {
    %c0_i32 = arith.constant 0 : i32
    %c0_i32_0 = arith.constant 0 : i32
    return %arg0, %c0_i32 : i32, i32
  }
}

</mosaic_0001>

<llo_original>
// kernel: tpu_custom_call.1
$region0: #{tpu_custom_call.1}
  #allocation0 [shape = 'u32[]', space=smem, size = 0x4, offset = 0x4, fixed_abs, tag = 'smem constant byte address 0x4 - core index']
  #allocation1 [shape = 'u32[72,128]{1,0:T(1,128)}', space=vmem, size = 0x9000, scoped, tag = 'internal scratch']
  #allocation2 [shape = 's32[1]{0}', space=sflag, size = 0x4, scoped, tag = 'scoped memory for tpu_custom_call.1']
  #allocation3 [shape = 'u8[512]{0}', space=smem, size = 0x200, scoped, tag = 'prefetched SMEM operand 0']
  %s0 = inlined_call_operand.hbm [shape: s32[16], index: 0, kind: input, shape index: {}]
  %s1 = inlined_call_operand.hbm [shape: f32[18,128], index: 1, kind: input, shape index: {}]
  %s2 = inlined_call_operand.hbm [shape: f32[16,128], index: 2, kind: output, shape index: {}]
  %s3 = sld [smem:[#allocation0]]
  $region18: #{tpu_custom_call.1} parent=0
    _
  %s5 = ssub.s32 1, %s3
  %s6 = scalar_select 0, %s5, %s3
  %s8 = sshll.u32 %s0, 4
  %s9 = int_to_ptr.hbm [resolvable:$true] %s8
  %11 = dma.hbm_to_smem %s9, 16, [#allocation3], [#allocation2]
  %13 = dma.done [#allocation2], 16
  %14 = sfence
  $region1: #{tpu_custom_call.1} parent=0
    #allocation4 [shape = 'u8[12288]{0}', space=vmem, size = 0x3000, scoped, tag = 'input window, operand 1, single buffered']
    #allocation5 [shape = 's32[1]{0}', space=sflag, size = 0x4, scoped, tag = 'scoped memory for tpu_custom_call.1']
    #allocation6 [shape = 's32[1]{0}', space=sflag, size = 0x4, scoped, tag = 'scoped memory for tpu_custom_call.1']
    #allocation7 [shape = 'u8[8192]{0}', space=vmem, size = 0x2000, scoped, tag = 'output window, operand 0, single buffered']
    %15 = vsyncpa [#allocation5], 0
    %16 = vsyncpa [#allocation6], 0
    // Predicated region
    $region2: #{tpu_custom_call.1} parent=1 // pred_check
      _
    $region3: #{tpu_custom_call.1} parent=1 // pred_check_branch
      %18 = sbr.rel (0) target = $region5
    $region4: #{tpu_custom_call.1} parent=1 // pred_region
      %20 = vsyncadd [#allocation5], 0
      %s21 = sshll.u32 %s1, 4
      %s22 = int_to_ptr.hbm [resolvable:$true] %s21
      %s23 = sshll.u32 [#allocation4], 4
      %s24 = int_to_ptr.vmem [resolvable:$true] %s23
      %29 = dma.hbm_to_vmem [thread:$0]  %s22, 384, %s24, [#allocation5], 128, 128, 8
    $region5: #{tpu_custom_call.1} parent=1 // pred_fallthru
      _
    // Predicated region
    $region6: #{tpu_custom_call.1} parent=1 // pred_check
      _
    $region7: #{tpu_custom_call.1} parent=1 // pred_check_branch
      %31 = sbr.rel (0) target = $region9
    $region8: #{tpu_custom_call.1} parent=1 // pred_region
      %33 = dma.done [#allocation5], 384
    $region9: #{tpu_custom_call.1} parent=1 // pred_fallthru
      _
    %s34 = smul.u32 0, 16
    %s35 = sld [smem:[#allocation3 + %s34]]
    %s36 = scalar_lea.vmem [#allocation4], %s35
    %v37 = vld [vmem:[%s36] sm:$0x1]
    %38 = vst [vmem:[#allocation7] sm:$0x1] %v37
    %s39 = sadd.s32 %s34, 1
    %s40 = sld [smem:[#allocation3 + %s39]]
    %s41 = scalar_lea.vmem [#allocation4], %s40
    %v42 = vld [vmem:[%s41] sm:$0x1]
    %43 = vst [vmem:[#allocation7 + $0x1] sm:$0x1] %v42
    %s44 = sadd.s32 %s34, 2
    %s45 = sld [smem:[#allocation3 + %s44]]
    %s46 = scalar_lea.vmem [#allocation4], %s45
    %v47 = vld [vmem:[%s46] sm:$0x1]
    %48 = vst [vmem:[#allocation7 + $0x2] sm:$0x1] %v47
    %s49 = sadd.s32 %s34, 3
    %s50 = sld [smem:[#allocation3 + %s49]]
    %s51 = scalar_lea.vmem [#allocation4], %s50
    %v52 = vld [vmem:[%s51] sm:$0x1]
    %53 = vst [vmem:[#allocation7 + $0x3] sm:$0x1] %v52
    %s54 = sadd.s32 %s34, 4
    %s55 = sld [smem:[#allocation3 + %s54]]
    %s56 = scalar_lea.vmem [#allocation4], %s55
    %v57 = vld [vmem:[%s56] sm:$0x1]
    %58 = vst [vmem:[#allocation7 + $0x4] sm:$0x1] %v57
    %s59 = sadd.s32 %s34, 5
    %s60 = sld [smem:[#allocation3 + %s59]]
    %s61 = scalar_lea.vmem [#allocation4], %s60
    %v62 = vld [vmem:[%s61] sm:$0x1]
    %63 = vst [vmem:[#allocation7 + $0x5] sm:$0x1] %v62
    %s64 = sadd.s32 %s34, 6
    %s65 = sld [smem:[#allocation3 + %s64]]
    %s66 = scalar_lea.vmem [#allocation4], %s65
    %v67 = vld [vmem:[%s66] sm:$0x1]
    %68 = vst [vmem:[#allocation7 + $0x6] sm:$0x1] %v67
    %s69 = sadd.s32 %s34, 7
    %s70 = sld [smem:[#allocation3 + %s69]]
    %s71 = scalar_lea.vmem [#allocation4], %s70
    %v72 = vld [vmem:[%s71] sm:$0x1]
    %73 = vst [vmem:[#allocation7 + $0x7] sm:$0x1] %v72
    %s74 = sadd.s32 %s34, 8
    %s75 = sld [smem:[#allocation3 + %s74]]
    %s76 = scalar_lea.vmem [#allocation4], %s75
    %v77 = vld [vmem:[%s76] sm:$0x1]
    %78 = vst [vmem:[#allocation7 + $0x8] sm:$0x1] %v77
    %s79 = sadd.s32 %s34, 9
    %s80 = sld [smem:[#allocation3 + %s79]]
    %s81 = scalar_lea.vmem [#allocation4], %s80
    %v82 = vld [vmem:[%s81] sm:$0x1]
    %83 = vst [vmem:[#allocation7 + $0x9] sm:$0x1] %v82
    %s84 = sadd.s32 %s34, 10
    %s85 = sld [smem:[#allocation3 + %s84]]
    %s86 = scalar_lea.vmem [#allocation4], %s85
    %v87 = vld [vmem:[%s86] sm:$0x1]
    %88 = vst [vmem:[#allocation7 + $0xa] sm:$0x1] %v87
    %s89 = sadd.s32 %s34, 11
    %s90 = sld [smem:[#allocation3 + %s89]]
    %s91 = scalar_lea.vmem [#allocation4], %s90
    %v92 = vld [vmem:[%s91] sm:$0x1]
    %93 = vst [vmem:[#allocation7 + $0xb] sm:$0x1] %v92
    %s94 = sadd.s32 %s34, 12
    %s95 = sld [smem:[#allocation3 + %s94]]
    %s96 = scalar_lea.vmem [#allocation4], %s95
    %v97 = vld [vmem:[%s96] sm:$0x1]
    %98 = vst [vmem:[#allocation7 + $0xc] sm:$0x1] %v97
    %s99 = sadd.s32 %s34, 13
    %s100 = sld [smem:[#allocation3 + %s99]]
    %s101 = scalar_lea.vmem [#allocation4], %s100
    %v102 = vld [vmem:[%s101] sm:$0x1]
    %103 = vst [vmem:[#allocation7 + $0xd] sm:$0x1] %v102
    %s104 = sadd.s32 %s34, 14
    %s105 = sld [smem:[#allocation3 + %s104]]
    %s106 = scalar_lea.vmem [#allocation4], %s105
    %v107 = vld [vmem:[%s106] sm:$0x1]
    %108 = vst [vmem:[#allocation7 + $0xe] sm:$0x1] %v107
    %s109 = sadd.s32 %s34, 15
    %s110 = sld [smem:[#allocation3 + %s109]]
    %s111 = scalar_lea.vmem [#allocation4], %s110
    %v112 = vld [vmem:[%s111] sm:$0x1]
    %113 = vst [vmem:[#allocation7 + $0xf] sm:$0x1] %v112
    // Predicated region
    $region10: #{tpu_custom_call.1} parent=1 // pred_check
      _
    $region11: #{tpu_custom_call.1} parent=1 // pred_check_branch
      %115 = sbr.rel (0) target = $region13
    $region12: #{tpu_custom_call.1} parent=1 // pred_region
      %117 = vsyncadd [#allocation6], 0
      %s118 = sshll.u32 [#allocation7], 4
      %s119 = int_to_ptr.vmem [resolvable:$true] %s118
      %s120 = sshll.u32 %s2, 4
      %s121 = int_to_ptr.hbm [resolvable:$true] %s120
      %126 = dma.vmem_to_hbm [thread:$0]  %s119, 256, %s121, [#allocation6], 128, 128, 8
    $region13: #{tpu_custom_call.1} parent=1 // pred_fallthru
      _
    // Predicated region
    $region14: #{tpu_custom_call.1} parent=1 // pred_check
      _
    $region15: #{tpu_custom_call.1} parent=1 // pred_check_branch
      %128 = sbr.rel (0) target = $region17
    $region16: #{tpu_custom_call.1} parent=1 // pred_region
      %130 = dma.done [#allocation6], 256
    $region17: #{tpu_custom_call.1} parent=1 // pred_fallthru
      _
    %131 = vsyncpa [#allocation5], 1
    %132 = vsyncpa [#allocation6], 1

</llo_original>
